<compile_context>
chip_gen: v6e
topology: v6e:2x2x1
jax: 0.10.0
libtpu: 0.0.40
codegen_flags: <defaults>
</compile_context>

<pallas_src>
import functools

import jax
import jax.numpy as jnp
from jax.experimental import pallas as pl
from jax.experimental.pallas import tpu as pltpu  # noqa: F401


LANE = 128


def _fused_gcn_kernel(adj_ref, dinv_ref, x_ref, w1_ref, b1_ref, w2_ref,
                      b2_ref, out_ref):
    adj = adj_ref[...]            # (N, N) bf16, raw 0/1 adjacency
    dinv = dinv_ref[...]          # (N, 1) f32, d^{-1/2}

    # ---- layer 1: D^{-1/2} A D^{-1/2} (X W1) + b1, then ReLU ----
    xw = jnp.dot(x_ref[...], w1_ref[...],
                 preferred_element_type=jnp.float32)        # (N, Hp)  MXU
    xw = xw * dinv                                           # prescale rows
    agg = jnp.dot(adj, xw.astype(jnp.bfloat16),
                  preferred_element_type=jnp.float32)        # (N, Hp)  MXU
    h = agg * dinv + b1_ref[...]                             # postscale + bias
    h = jnp.maximum(h, 0.0)                                  # ReLU

    # F.dropout(training=self.training): identity at inference.
    # TODO(synk): training-mode dropout (pltpu.prng_seed + prng_random_bits
    # mask * 1/(1-p)) not emitted; this reproduces eval semantics.

    # ---- layer 2: D^{-1/2} A D^{-1/2} (H W2) + b2 ----
    hw = jnp.dot(h.astype(jnp.bfloat16), w2_ref[...],
                 preferred_element_type=jnp.float32)         # (N, Cp)  MXU
    hw = hw * dinv
    agg2 = jnp.dot(adj, hw.astype(jnp.bfloat16),
                   preferred_element_type=jnp.float32)       # (N, Cp)  MXU
    out_ref[...] = (agg2 * dinv + b2_ref[...]).astype(out_ref.dtype)


def _round_up(x, m):
    return pl.cdiv(x, m) * m


def _pad2d(a, rows, cols, dtype):
    return jnp.pad(a.astype(dtype), ((0, rows - a.shape[0]),
                                     (0, cols - a.shape[1])))


def gcn_baseline_forward(adj, x, params, dropout_p=0.1, training=False):
    """Forward pass matching GCNBaseline.forward(g, x) (eval semantics)."""
    n, in_dim = x.shape
    hidden = params["w1"].shape[1]
    n_classes = params["w2"].shape[1]

    # lane-dense padded feature widths
    f_in_p = _round_up(in_dim, LANE)
    f_h_p = _round_up(hidden, LANE)
    f_out_p = _round_up(n_classes, LANE)

    # degree^-1/2 (symmetric norm, computed once; never materialize norm'd A)
    deg = jnp.sum(adj.astype(jnp.float32), axis=1)
    dinv = jnp.where(deg > 0, jax.lax.rsqrt(deg), 0.0)
    dinv = dinv.reshape(n, 1).astype(jnp.float32)

    adj_bf = adj.astype(jnp.bfloat16)
    x_p = _pad2d(x, n, f_in_p, jnp.bfloat16)
    w1_p = _pad2d(params["w1"], f_in_p, f_h_p, jnp.bfloat16)
    w2_p = _pad2d(params["w2"], f_h_p, f_out_p, jnp.bfloat16)
    b1_p = _pad2d(params["b1"].reshape(1, hidden), 1, f_h_p, jnp.float32)
    b2_p = _pad2d(params["b2"].reshape(1, n_classes), 1, f_out_p, jnp.float32)

    out = pl.pallas_call(
        _fused_gcn_kernel,
        out_shape=jax.ShapeDtypeStruct((n, f_out_p), jnp.float32),
        in_specs=[
            pl.BlockSpec((n, n), lambda: (0, 0)),          # adjacency (bf16)
            pl.BlockSpec((n, 1), lambda: (0, 0)),          # d^{-1/2}
            pl.BlockSpec((n, f_in_p), lambda: (0, 0)),     # x
            pl.BlockSpec((f_in_p, f_h_p), lambda: (0, 0)),  # w1
            pl.BlockSpec((1, f_h_p), lambda: (0, 0)),      # b1
            pl.BlockSpec((f_h_p, f_out_p), lambda: (0, 0)),  # w2
            pl.BlockSpec((1, f_out_p), lambda: (0, 0)),    # b2
        ],
        out_specs=pl.BlockSpec((n, f_out_p), lambda: (0, 0)),
    )(adj_bf, dinv, x_p, w1_p, b1_p, w2_p, b2_p)

    return out[:, :n_classes]


def init_params(key, in_dim, hidden_dim, n_classes):
    k1, k2 = jax.random.split(key)

    def glorot(k, fan_in, fan_out):
        lim = jnp.sqrt(6.0 / (fan_in + fan_out))
        return jax.random.uniform(k, (fan_in, fan_out), jnp.float32, -lim, lim)

    return {
        "w1": glorot(k1, in_dim, hidden_dim),
        "b1": jnp.zeros((hidden_dim,), jnp.float32),
        "w2": glorot(k2, hidden_dim, n_classes),
        "b2": jnp.zeros((n_classes,), jnp.float32),
    }


if __name__ == "__main__":
    # net_params = {'in_dim': 8, 'hidden_dim': 32, 'n_classes': 4, 'dropout': 0.1}
    N, IN_DIM, HIDDEN, N_CLASSES = 16, 8, 32, 4

    key = jax.random.PRNGKey(0)
    k_adj, k_x, k_par = jax.random.split(key, 3)

    # Deterministic small random undirected graph with self-loops.
    rand = jax.random.uniform(k_adj, (N, N))
    adj = (rand < 0.3).astype(jnp.float32)
    adj = jnp.maximum(adj, adj.T)                              # symmetrize
    adj = jnp.maximum(adj, jnp.eye(N, dtype=jnp.float32))      # self-loops

    x = jax.random.normal(k_x, (N, IN_DIM), jnp.float32)
    params = init_params(k_par, IN_DIM, HIDDEN, N_CLASSES)

    logits = gcn_baseline_forward(adj, x, params, dropout_p=0.1, training=False)
    logits = jax.block_until_ready(logits)

    # Pure-JAX f32 reference (loose tolerance: kernel uses bf16 MXU operands).
    deg = jnp.sum(adj, axis=1)
    d_inv_sqrt = jnp.where(deg > 0, 1.0 / jnp.sqrt(deg), 0.0)
    adj_n = adj * d_inv_sqrt[:, None] * d_inv_sqrt[None, :]
    h_ref = jnp.maximum(adj_n @ (x @ params["w1"]) + params["b1"], 0.0)
    ref = adj_n @ (h_ref @ params["w2"]) + params["b2"]

    assert logits.shape == (N, N_CLASSES)
    assert jnp.allclose(logits, ref, atol=5e-2, rtol=5e-2), (
        float(jnp.max(jnp.abs(logits - ref))))

    print("KERNEL_OK")
</pallas_src>

<mosaic_0001>
module attributes {stable_mosaic.version = 11 : i64} {
  func.func @_fused_gcn_kernel(%arg0: memref<16x16xbf16, #tpu.memory_space<vmem>>, %arg1: memref<16x1xf32, #tpu.memory_space<vmem>>, %arg2: memref<16x128xbf16, #tpu.memory_space<vmem>>, %arg3: memref<128x128xbf16, #tpu.memory_space<vmem>>, %arg4: memref<1x128xf32, #tpu.memory_space<vmem>>, %arg5: memref<128x128xbf16, #tpu.memory_space<vmem>>, %arg6: memref<1x128xf32, #tpu.memory_space<vmem>>, %arg7: memref<16x128xf32, #tpu.memory_space<vmem>>) attributes {dimension_semantics = [], scalar_prefetch = 0 : i64, scratch_operands = 0 : i64, tpu.core_type = #tpu.core_type<tc>} {
    %c0 = arith.constant 0 : index
    %c0_0 = arith.constant 0 : index
    %0 = vector.load %arg0[%c0, %c0_0] : memref<16x16xbf16, #tpu.memory_space<vmem>>, vector<16x16xbf16>
    %c0_1 = arith.constant 0 : index
    %c0_2 = arith.constant 0 : index
    %1 = vector.load %arg1[%c0_1, %c0_2] : memref<16x1xf32, #tpu.memory_space<vmem>>, vector<16x1xf32>
    %c0_3 = arith.constant 0 : index
    %c0_4 = arith.constant 0 : index
    %2 = vector.load %arg2[%c0_3, %c0_4] : memref<16x128xbf16, #tpu.memory_space<vmem>>, vector<16x128xbf16>
    %c0_5 = arith.constant 0 : index
    %c0_6 = arith.constant 0 : index
    %3 = vector.load %arg3[%c0_5, %c0_6] : memref<128x128xbf16, #tpu.memory_space<vmem>>, vector<128x128xbf16>
    %cst = arith.constant dense<0.000000e+00> : vector<16x128xf32>
    %4 = tpu.matmul %2, %3, %cst {dimension_numbers = #tpu.dot_dimension_numbers<[1], [0], [0], [1], [0, 0, 1, 1], [], []>} : vector<16x128xbf16>, vector<128x128xbf16>, vector<16x128xf32> -> vector<16x128xf32>
    %5 = vector.broadcast %1 : vector<16x1xf32> to vector<16x128xf32>
    %6 = arith.mulf %4, %5 : vector<16x128xf32>
    %7 = arith.truncf %6 : vector<16x128xf32> to vector<16x128xbf16>
    %cst_7 = arith.constant dense<0.000000e+00> : vector<16x128xf32>
    %8 = tpu.matmul %0, %7, %cst_7 {dimension_numbers = #tpu.dot_dimension_numbers<[1], [0], [0], [1], [0, 0, 1, 1], [], []>} : vector<16x16xbf16>, vector<16x128xbf16>, vector<16x128xf32> -> vector<16x128xf32>
    %9 = vector.broadcast %1 : vector<16x1xf32> to vector<16x128xf32>
    %10 = arith.mulf %8, %9 : vector<16x128xf32>
    %c0_8 = arith.constant 0 : index
    %c0_9 = arith.constant 0 : index
    %11 = vector.load %arg4[%c0_8, %c0_9] : memref<1x128xf32, #tpu.memory_space<vmem>>, vector<1x128xf32>
    %12 = vector.broadcast %11 : vector<1x128xf32> to vector<16x128xf32>
    %13 = arith.addf %10, %12 : vector<16x128xf32>
    %cst_10 = arith.constant 0.000000e+00 : f32
    %14 = vector.broadcast %cst_10 : f32 to vector<16x128xf32>
    %15 = arith.maximumf %13, %14 : vector<16x128xf32>
    %16 = arith.truncf %15 : vector<16x128xf32> to vector<16x128xbf16>
    %c0_11 = arith.constant 0 : index
    %c0_12 = arith.constant 0 : index
    %17 = vector.load %arg5[%c0_11, %c0_12] : memref<128x128xbf16, #tpu.memory_space<vmem>>, vector<128x128xbf16>
    %cst_13 = arith.constant dense<0.000000e+00> : vector<16x128xf32>
    %18 = tpu.matmul %16, %17, %cst_13 {dimension_numbers = #tpu.dot_dimension_numbers<[1], [0], [0], [1], [0, 0, 1, 1], [], []>} : vector<16x128xbf16>, vector<128x128xbf16>, vector<16x128xf32> -> vector<16x128xf32>
    %19 = vector.broadcast %1 : vector<16x1xf32> to vector<16x128xf32>
    %20 = arith.mulf %18, %19 : vector<16x128xf32>
    %21 = arith.truncf %20 : vector<16x128xf32> to vector<16x128xbf16>
    %cst_14 = arith.constant dense<0.000000e+00> : vector<16x128xf32>
    %22 = tpu.matmul %0, %21, %cst_14 {dimension_numbers = #tpu.dot_dimension_numbers<[1], [0], [0], [1], [0, 0, 1, 1], [], []>} : vector<16x16xbf16>, vector<16x128xbf16>, vector<16x128xf32> -> vector<16x128xf32>
    %23 = vector.broadcast %1 : vector<16x1xf32> to vector<16x128xf32>
    %24 = arith.mulf %22, %23 : vector<16x128xf32>
    %c0_15 = arith.constant 0 : index
    %c0_16 = arith.constant 0 : index
    %25 = vector.load %arg6[%c0_15, %c0_16] : memref<1x128xf32, #tpu.memory_space<vmem>>, vector<1x128xf32>
    %26 = vector.broadcast %25 : vector<1x128xf32> to vector<16x128xf32>
    %27 = arith.addf %24, %26 : vector<16x128xf32>
    %c0_17 = arith.constant 0 : index
    %c0_18 = arith.constant 0 : index
    %28 = vector.load %arg7[%c0_17, %c0_18] : memref<16x128xf32, #tpu.memory_space<vmem>>, vector<16x128xf32>
    tpu.vector_store %arg7[%c0_17, %c0_18], %27 {strides = array<i32>} : memref<16x128xf32, #tpu.memory_space<vmem>>, vector<16x128xf32>,
    return
  }
}

</mosaic_0001>

<llo_original>
// kernel: tpu_custom_call.1
$region0: #{tpu_custom_call.1}
  #allocation0 [shape = 'u32[]', space=smem, size = 0x4, offset = 0x4, fixed_abs, tag = 'smem constant byte address 0x4 - core index']
  #allocation1 [shape = 'u32[144,128]{1,0:T(1,128)}', space=vmem, size = 0x12000, scoped, tag = 'internal scratch']
  %s0 = inlined_call_operand.vmem [shape: bf16[16,16], index: 0, kind: input, shape index: {}]
  %s1 = inlined_call_operand.vmem [shape: f32[16,1], index: 1, kind: input, shape index: {}]
  %s2 = inlined_call_operand.vmem [shape: bf16[16,128], index: 2, kind: input, shape index: {}]
  %s3 = inlined_call_operand.hbm [shape: bf16[128,128], index: 3, kind: input, shape index: {}]
  %s4 = inlined_call_operand.vmem [shape: f32[1,128], index: 4, kind: input, shape index: {}]
  %s5 = inlined_call_operand.hbm [shape: bf16[128,128], index: 5, kind: input, shape index: {}]
  %s6 = inlined_call_operand.vmem [shape: f32[1,128], index: 6, kind: input, shape index: {}]
  %s7 = inlined_call_operand.hbm [shape: f32[16,128], index: 7, kind: output, shape index: {}]
  %s8 = sld [smem:[#allocation0]]
  $region46: #{tpu_custom_call.1} parent=0
    _
  %s10 = ssub.s32 1, %s8
  %s11 = scalar_select 0, %s10, %s8
  $region1: #{tpu_custom_call.1} parent=0
    #allocation2 [shape = 'u8[32768]{0}', space=vmem, size = 0x8000, scoped, tag = 'input window, operand 3, single buffered']
    #allocation3 [shape = 's32[1]{0}', space=sflag, size = 0x4, scoped, tag = 'scoped memory for tpu_custom_call.1']
    #allocation4 [shape = 's32[1]{0}', space=sflag, size = 0x4, scoped, tag = 'scoped memory for tpu_custom_call.1']
    #allocation5 [shape = 'u8[32768]{0}', space=vmem, size = 0x8000, scoped, tag = 'input window, operand 5, single buffered']
    #allocation6 [shape = 's32[1]{0}', space=sflag, size = 0x4, scoped, tag = 'scoped memory for tpu_custom_call.1']
    #allocation7 [shape = 'u8[8192]{0}', space=vmem, size = 0x2000, scoped, tag = 'output window, operand 0, single buffered']
    %12 = vsyncpa [#allocation3], 0
    %13 = vsyncpa [#allocation6], 0
    %14 = vsyncpa [#allocation4], 0
    // Predicated region
    $region2: #{tpu_custom_call.1} parent=1 // pred_check
      _
    $region3: #{tpu_custom_call.1} parent=1 // pred_check_branch
      %16 = sbr.rel (0) target = $region5
    $region4: #{tpu_custom_call.1} parent=1 // pred_region
      _
    $region5: #{tpu_custom_call.1} parent=1 // pred_fallthru
      _
    // Predicated region
    $region6: #{tpu_custom_call.1} parent=1 // pred_check
      _
    $region7: #{tpu_custom_call.1} parent=1 // pred_check_branch
      %18 = sbr.rel (0) target = $region9
    $region8: #{tpu_custom_call.1} parent=1 // pred_region
      _
    $region9: #{tpu_custom_call.1} parent=1 // pred_fallthru
      _
    // Predicated region
    $region10: #{tpu_custom_call.1} parent=1 // pred_check
      _
    $region11: #{tpu_custom_call.1} parent=1 // pred_check_branch
      %20 = sbr.rel (0) target = $region13
    $region12: #{tpu_custom_call.1} parent=1 // pred_region
      _
    $region13: #{tpu_custom_call.1} parent=1 // pred_fallthru
      _
    // Predicated region
    $region14: #{tpu_custom_call.1} parent=1 // pred_check
      _
    $region15: #{tpu_custom_call.1} parent=1 // pred_check_branch
      %22 = sbr.rel (0) target = $region17
    $region16: #{tpu_custom_call.1} parent=1 // pred_region
      %s24 = ssub.s32 1024, 1024
      %25 = vsyncadd [#allocation3], %s24
      %s26 = sshll.u32 [#allocation2], 4
      %s27 = int_to_ptr.vmem [resolvable:$true] %s26
      %32 = dma.hbm_to_vmem [thread:$0]  %s3, 1024, %s27, [#allocation3], 64, 64, 4
    $region17: #{tpu_custom_call.1} parent=1 // pred_fallthru
      _
    // Predicated region
    $region18: #{tpu_custom_call.1} parent=1 // pred_check
      _
    $region19: #{tpu_custom_call.1} parent=1 // pred_check_branch
      %34 = sbr.rel (0) target = $region21
    $region20: #{tpu_custom_call.1} parent=1 // pred_region
      _
    $region21: #{tpu_custom_call.1} parent=1 // pred_fallthru
      _
    // Predicated region
    $region22: #{tpu_custom_call.1} parent=1 // pred_check
      _
    $region23: #{tpu_custom_call.1} parent=1 // pred_check_branch
      %36 = sbr.rel (0) target = $region25
    $region24: #{tpu_custom_call.1} parent=1 // pred_region
      %s38 = ssub.s32 1024, 1024
      %39 = vsyncadd [#allocation6], %s38
      %s40 = sshll.u32 [#allocation5], 4
      %s41 = int_to_ptr.vmem [resolvable:$true] %s40
      %46 = dma.hbm_to_vmem [thread:$0]  %s5, 1024, %s41, [#allocation6], 64, 64, 4
    $region25: #{tpu_custom_call.1} parent=1 // pred_fallthru
      _
    // Predicated region
    $region26: #{tpu_custom_call.1} parent=1 // pred_check
      _
    $region27: #{tpu_custom_call.1} parent=1 // pred_check_branch
      %48 = sbr.rel (0) target = $region29
    $region28: #{tpu_custom_call.1} parent=1 // pred_region
      _
    $region29: #{tpu_custom_call.1} parent=1 // pred_fallthru
      _
    // Predicated region
    $region30: #{tpu_custom_call.1} parent=1 // pred_check
      _
    $region31: #{tpu_custom_call.1} parent=1 // pred_check_branch
      %50 = sbr.rel (0) target = $region33
    $region32: #{tpu_custom_call.1} parent=1 // pred_region
      %51 = dma.done [#allocation3], 1024
    $region33: #{tpu_custom_call.1} parent=1 // pred_fallthru
      _
    // Predicated region
    $region34: #{tpu_custom_call.1} parent=1 // pred_check
      _
    $region35: #{tpu_custom_call.1} parent=1 // pred_check_branch
      %53 = sbr.rel (0) target = $region37
    $region36: #{tpu_custom_call.1} parent=1 // pred_region
      %54 = dma.done [#allocation6], 1024
    $region37: #{tpu_custom_call.1} parent=1 // pred_fallthru
      _
    %v56 = vld [vmem:[%s0] sm:$0xf]
    %v57 = vld [vmem:[%s0 + $0x4] sm:$0xf]
    %v58 = vld [vmem:[%s1] sm:$0xff]
    %v59 = vld [vmem:[%s1 + $0x8] sm:$0xff]
    %v60 = vld [vmem:[%s2] sm:$0xf]
    %v61 = vld [vmem:[%s2 + $0x4] sm:$0xf]
    %v62 = vld [vmem:[#allocation2] sm:$0xf]
    %v63 = vld [vmem:[#allocation2 + $0x4] sm:$0xf]
    %v64 = vld [vmem:[#allocation2 + $0x8] sm:$0xf]
    %v65 = vld [vmem:[#allocation2 + $0xc] sm:$0xf]
    %v66 = vld [vmem:[#allocation2 + $0x10] sm:$0xf]
    %v67 = vld [vmem:[#allocation2 + $0x14] sm:$0xf]
    %v68 = vld [vmem:[#allocation2 + $0x18] sm:$0xf]
    %v69 = vld [vmem:[#allocation2 + $0x1c] sm:$0xf]
    %v70 = vld [vmem:[#allocation2 + $0x20] sm:$0xf]
    %v71 = vld [vmem:[#allocation2 + $0x24] sm:$0xf]
    %v72 = vld [vmem:[#allocation2 + $0x28] sm:$0xf]
    %v73 = vld [vmem:[#allocation2 + $0x2c] sm:$0xf]
    %v74 = vld [vmem:[#allocation2 + $0x30] sm:$0xf]
    %v75 = vld [vmem:[#allocation2 + $0x34] sm:$0xf]
    %v76 = vld [vmem:[#allocation2 + $0x38] sm:$0xf]
    %v77 = vld [vmem:[#allocation2 + $0x3c] sm:$0xf]
    %v80 = vunpack.c.l.b16 %v60
    %v81 = vunpack.c.l.b16 %v61
    %v82 = vpack.c.b16 %v81, %v80
    %v100 = vunpack.c.l.b16 %v62
    %v101 = vunpack.c.l.b16 %v63
    %v102 = vunpack.c.l.b16 %v64
    %v103 = vunpack.c.l.b16 %v65
    %v104 = vunpack.c.l.b16 %v66
    %v105 = vunpack.c.l.b16 %v67
    %v106 = vunpack.c.l.b16 %v68
    %v107 = vunpack.c.l.b16 %v69
    %v108 = vunpack.c.l.b16 %v70
    %v109 = vunpack.c.l.b16 %v71
    %v110 = vunpack.c.l.b16 %v72
    %v111 = vunpack.c.l.b16 %v73
    %v112 = vunpack.c.l.b16 %v74
    %v113 = vunpack.c.l.b16 %v75
    %v114 = vunpack.c.l.b16 %v76
    %v115 = vunpack.c.l.b16 %v77
    %v116 = vpack.c.b16 %v101, %v100
    %v117 = vpack.c.b16 %v103, %v102
    %v118 = vpack.c.b16 %v105, %v104
    %v119 = vpack.c.b16 %v107, %v106
    %v120 = vpack.c.b16 %v109, %v108
    %v121 = vpack.c.b16 %v111, %v110
    %v122 = vpack.c.b16 %v113, %v112
    %v123 = vpack.c.b16 %v115, %v114
    %132 = vmatprep.subr.bf16.mxu0 0
    %133 = vmatpush1.bf16.msra.mxu0 %v123
    %134 = vmatprep.subr.bf16.mxu0 0
    %135 = vmatpush1.bf16.msra.mxu0 %v122
    %136 = vmatprep.subr.bf16.mxu0 0
    %137 = vmatpush1.bf16.msra.mxu0 %v121
    %138 = vmatprep.subr.bf16.mxu0 0
    %139 = vmatpush1.bf16.msra.mxu0 %v120
    %140 = vmatprep.subr.bf16.mxu0 0
    %141 = vmatpush1.bf16.msra.mxu0 %v119
    %142 = vmatprep.subr.bf16.mxu0 0
    %143 = vmatpush1.bf16.msra.mxu0 %v118
    %144 = vmatprep.subr.bf16.mxu0 0
    %145 = vmatpush1.bf16.msra.mxu0 %v117
    %146 = vmatprep.subr.bf16.mxu0 0
    %147 = vmatpush1.bf16.msra.mxu0 %v116
    %148 = vmatprep.subr.bf16.mxu0 0
    %149 = vmatpush2.bf16.msra.mxu0 0
    %150 = vmatprep.subr.bf16.mxu0 0
    %151 = vmatpush2.bf16.msra.mxu0 0
    %152 = vmatprep.subr.bf16.mxu0 0
    %153 = vmatpush2.bf16.msra.mxu0 0
    %154 = vmatprep.subr.bf16.mxu0 0
    %155 = vmatpush2.bf16.msra.mxu0 0
    %156 = vmatprep.subr.bf16.mxu0 0
    %157 = vmatpush2.bf16.msra.mxu0 0
    %158 = vmatprep.subr.bf16.mxu0 0
    %159 = vmatpush2.bf16.msra.mxu0 0
    %160 = vmatprep.subr.bf16.mxu0 0
    %161 = vmatpush2.bf16.msra.mxu0 0
    %162 = vmatprep.subr.bf16.mxu0 0
    %163 = vmatpush2.bf16.msra.mxu0 0
    %164 = vmatprep.mubr.bf16.mxu0 0
    %165 = vmatmul.mubr.bf16.gmra.mxu0 %v82
    %v166 = vpop.f32.mrf.mxu0
    %v167 = vadd.f32 0.0, %v166
    %v168 = vpop.f32.mrf.mxu0
    %v169 = vpop.f32.mrf.mxu0
    %v170 = vadd.f32 0.0, %v169
    %v171 = vpop.f32.mrf.mxu0
    %172 = vdwg.mxu0
    %174 = vset.pattern.permute.xlu0 0
    %175 = vperm.xlu0 %174, %v58
    %v176 = vpop.permute.xlu0 %175
    %179 = vset.pattern.permute.xlu0 0
    %180 = vperm.xlu0 %179, %v59
    %v181 = vpop.permute.xlu0 %180
    %v183 = vmul.f32 %v167, %v176
    %v184 = vmul.f32 %v170, %v181
    %v185 = vpack.c.bf16 %v184, %v183
    %v188 = vunpack.c.l.b16 %v56
    %v189 = vunpack.c.l.b16 %v57
    %v190 = vpack.c.b16 %v189, %v188
    %vm191 = vcmask 130048
    %v193 = vsel %vm191, %v190, 0
    %195 = vmatprep.subr.bf16.mxu0 0
    %196 = vmatpush1.bf16.msra.mxu0 0
    %197 = vmatprep.subr.bf16.mxu0 0
    %198 = vmatpush1.bf16.msra.mxu0 0
    %199 = vmatprep.subr.bf16.mxu0 0
    %200 = vmatpush1.bf16.msra.mxu0 0
    %201 = vmatprep.subr.bf16.mxu0 0
    %202 = vmatpush1.bf16.msra.mxu0 0
    %203 = vmatprep.subr.bf16.mxu0 0
    %204 = vmatpush1.bf16.msra.mxu0 0
    %205 = vmatprep.subr.bf16.mxu0 0
    %206 = vmatpush1.bf16.msra.mxu0 0
    %207 = vmatprep.subr.bf16.mxu0 0
    %208 = vmatpush1.bf16.msra.mxu0 0
    %209 = vmatprep.subr.bf16.mxu0 0
    %210 = vmatpush1.bf16.msra.mxu0 %v185
    %211 = vmatprep.subr.bf16.mxu0 0
    %212 = vmatpush2.bf16.msra.mxu0 0
    %213 = vmatprep.subr.bf16.mxu0 0
    %214 = vmatpush2.bf16.msra.mxu0 0
    %215 = vmatprep.subr.bf16.mxu0 0
    %216 = vmatpush2.bf16.msra.mxu0 0
    %217 = vmatprep.subr.bf16.mxu0 0
    %218 = vmatpush2.bf16.msra.mxu0 0
    %219 = vmatprep.subr.bf16.mxu0 0
    %220 = vmatpush2.bf16.msra.mxu0 0
    %221 = vmatprep.subr.bf16.mxu0 0
    %222 = vmatpush2.bf16.msra.mxu0 0
    %223 = vmatprep.subr.bf16.mxu0 0
    %224 = vmatpush2.bf16.msra.mxu0 0
    %225 = vmatprep.subr.bf16.mxu0 0
    %226 = vmatpush2.bf16.msra.mxu0 0
    %227 = vmatprep.mubr.bf16.mxu0 0
    %228 = vmatmul.mubr.bf16.gmra.mxu0 %v193
    %v229 = vpop.f32.mrf.mxu0
    %v230 = vadd.f32 0.0, %v229
    %v231 = vpop.f32.mrf.mxu0
    %v232 = vpop.f32.mrf.mxu0
    %v233 = vadd.f32 0.0, %v232
    %v234 = vpop.f32.mrf.mxu0
    %235 = vdwg.mxu0
    %v236 = vmul.f32 %v230, %v176
    %v237 = vmul.f32 %v233, %v181
    %v238 = vld [vmem:[%s4] sm:$0x1]
    %v240 = vlaneseq
    %v241 = vshrl.u32 %v240, 7
    %v242 = vsub.s32 0, %v241
    %v243 = vrot.slane %v238, %v242
    %v245 = vadd.f32 %v236, %v243
    %v246 = vadd.f32 %v237, %v243
    %v247 = vmax.f32 %v245, 0.0
    %v248 = vmax.f32 %v246, 0.0
    %v249 = vpack.c.bf16 %v248, %v247
    %v250 = vld [vmem:[#allocation5] sm:$0xf]
    %v251 = vld [vmem:[#allocation5 + $0x4] sm:$0xf]
    %v252 = vld [vmem:[#allocation5 + $0x8] sm:$0xf]
    %v253 = vld [vmem:[#allocation5 + $0xc] sm:$0xf]
    %v254 = vld [vmem:[#allocation5 + $0x10] sm:$0xf]
    %v255 = vld [vmem:[#allocation5 + $0x14] sm:$0xf]
    %v256 = vld [vmem:[#allocation5 + $0x18] sm:$0xf]
    %v257 = vld [vmem:[#allocation5 + $0x1c] sm:$0xf]
    %v258 = vld [vmem:[#allocation5 + $0x20] sm:$0xf]
    %v259 = vld [vmem:[#allocation5 + $0x24] sm:$0xf]
    %v260 = vld [vmem:[#allocation5 + $0x28] sm:$0xf]
    %v261 = vld [vmem:[#allocation5 + $0x2c] sm:$0xf]
    %v262 = vld [vmem:[#allocation5 + $0x30] sm:$0xf]
    %v263 = vld [vmem:[#allocation5 + $0x34] sm:$0xf]
    %v264 = vld [vmem:[#allocation5 + $0x38] sm:$0xf]
    %v265 = vld [vmem:[#allocation5 + $0x3c] sm:$0xf]
    %v282 = vunpack.c.l.b16 %v250
    %v283 = vunpack.c.l.b16 %v251
    %v284 = vunpack.c.l.b16 %v252
    %v285 = vunpack.c.l.b16 %v253
    %v286 = vunpack.c.l.b16 %v254
    %v287 = vunpack.c.l.b16 %v255
    %v288 = vunpack.c.l.b16 %v256
    %v289 = vunpack.c.l.b16 %v257
    %v290 = vunpack.c.l.b16 %v258
    %v291 = vunpack.c.l.b16 %v259
    %v292 = vunpack.c.l.b16 %v260
    %v293 = vunpack.c.l.b16 %v261
    %v294 = vunpack.c.l.b16 %v262
    %v295 = vunpack.c.l.b16 %v263
    %v296 = vunpack.c.l.b16 %v264
    %v297 = vunpack.c.l.b16 %v265
    %v298 = vpack.c.b16 %v283, %v282
    %v299 = vpack.c.b16 %v285, %v284
    %v300 = vpack.c.b16 %v287, %v286
    %v301 = vpack.c.b16 %v289, %v288
    %v302 = vpack.c.b16 %v291, %v290
    %v303 = vpack.c.b16 %v293, %v292
    %v304 = vpack.c.b16 %v295, %v294
    %v305 = vpack.c.b16 %v297, %v296
    %314 = vmatprep.subr.bf16.mxu0 0
    %315 = vmatpush1.bf16.msra.mxu0 %v305
    %316 = vmatprep.subr.bf16.mxu0 0
    %317 = vmatpush1.bf16.msra.mxu0 %v304
    %318 = vmatprep.subr.bf16.mxu0 0
    %319 = vmatpush1.bf16.msra.mxu0 %v303
    %320 = vmatprep.subr.bf16.mxu0 0
    %321 = vmatpush1.bf16.msra.mxu0 %v302
    %322 = vmatprep.subr.bf16.mxu0 0
    %323 = vmatpush1.bf16.msra.mxu0 %v301
    %324 = vmatprep.subr.bf16.mxu0 0
    %325 = vmatpush1.bf16.msra.mxu0 %v300
    %326 = vmatprep.subr.bf16.mxu0 0
    %327 = vmatpush1.bf16.msra.mxu0 %v299
    %328 = vmatprep.subr.bf16.mxu0 0
    %329 = vmatpush1.bf16.msra.mxu0 %v298
    %330 = vmatprep.subr.bf16.mxu0 0
    %331 = vmatpush2.bf16.msra.mxu0 0
    %332 = vmatprep.subr.bf16.mxu0 0
    %333 = vmatpush2.bf16.msra.mxu0 0
    %334 = vmatprep.subr.bf16.mxu0 0
    %335 = vmatpush2.bf16.msra.mxu0 0
    %336 = vmatprep.subr.bf16.mxu0 0
    %337 = vmatpush2.bf16.msra.mxu0 0
    %338 = vmatprep.subr.bf16.mxu0 0
    %339 = vmatpush2.bf16.msra.mxu0 0
    %340 = vmatprep.subr.bf16.mxu0 0
    %341 = vmatpush2.bf16.msra.mxu0 0
    %342 = vmatprep.subr.bf16.mxu0 0
    %343 = vmatpush2.bf16.msra.mxu0 0
    %344 = vmatprep.subr.bf16.mxu0 0
    %345 = vmatpush2.bf16.msra.mxu0 0
    %346 = vmatprep.mubr.bf16.mxu0 0
    %347 = vmatmul.mubr.bf16.gmra.mxu0 %v249
    %v348 = vpop.f32.mrf.mxu0
    %v349 = vadd.f32 0.0, %v348
    %v350 = vpop.f32.mrf.mxu0
    %v351 = vpop.f32.mrf.mxu0
    %v352 = vadd.f32 0.0, %v351
    %v353 = vpop.f32.mrf.mxu0
    %354 = vdwg.mxu0
    %v355 = vmul.f32 %v349, %v176
    %v356 = vmul.f32 %v352, %v181
    %v357 = vpack.c.bf16 %v356, %v355
    %358 = vmatprep.subr.bf16.mxu0 0
    %359 = vmatpush1.bf16.msra.mxu0 0
    %360 = vmatprep.subr.bf16.mxu0 0
    %361 = vmatpush1.bf16.msra.mxu0 0
    %362 = vmatprep.subr.bf16.mxu0 0
    %363 = vmatpush1.bf16.msra.mxu0 0
    %364 = vmatprep.subr.bf16.mxu0 0
    %365 = vmatpush1.bf16.msra.mxu0 0
    %366 = vmatprep.subr.bf16.mxu0 0
    %367 = vmatpush1.bf16.msra.mxu0 0
    %368 = vmatprep.subr.bf16.mxu0 0
    %369 = vmatpush1.bf16.msra.mxu0 0
    %370 = vmatprep.subr.bf16.mxu0 0
    %371 = vmatpush1.bf16.msra.mxu0 0
    %372 = vmatprep.subr.bf16.mxu0 0
    %373 = vmatpush1.bf16.msra.mxu0 %v357
    %374 = vmatprep.subr.bf16.mxu0 0
    %375 = vmatpush2.bf16.msra.mxu0 0
    %376 = vmatprep.subr.bf16.mxu0 0
    %377 = vmatpush2.bf16.msra.mxu0 0
    %378 = vmatprep.subr.bf16.mxu0 0
    %379 = vmatpush2.bf16.msra.mxu0 0
    %380 = vmatprep.subr.bf16.mxu0 0
    %381 = vmatpush2.bf16.msra.mxu0 0
    %382 = vmatprep.subr.bf16.mxu0 0
    %383 = vmatpush2.bf16.msra.mxu0 0
    %384 = vmatprep.subr.bf16.mxu0 0
    %385 = vmatpush2.bf16.msra.mxu0 0
    %386 = vmatprep.subr.bf16.mxu0 0
    %387 = vmatpush2.bf16.msra.mxu0 0
    %388 = vmatprep.subr.bf16.mxu0 0
    %389 = vmatpush2.bf16.msra.mxu0 0
    %390 = vmatprep.mubr.bf16.mxu0 0
    %391 = vmatmul.mubr.bf16.gmra.mxu0 %v193
    %v392 = vpop.f32.mrf.mxu0
    %v393 = vadd.f32 0.0, %v392
    %v394 = vpop.f32.mrf.mxu0
    %v395 = vpop.f32.mrf.mxu0
    %v396 = vadd.f32 0.0, %v395
    %v397 = vpop.f32.mrf.mxu0
    %398 = vdwg.mxu0
    %v399 = vmul.f32 %v393, %v176
    %v400 = vmul.f32 %v396, %v181
    %v401 = vld [vmem:[%s6] sm:$0x1]
    %v403 = vlaneseq
    %v404 = vshrl.u32 %v403, 7
    %v405 = vsub.s32 0, %v404
    %v406 = vrot.slane %v401, %v405
    %v408 = vadd.f32 %v399, %v406
    %v409 = vadd.f32 %v400, %v406
    %410 = vst [vmem:[#allocation7] sm:$0xff] %v408
    %411 = vst [vmem:[#allocation7 + $0x8] sm:$0xff] %v409
    // Predicated region
    $region38: #{tpu_custom_call.1} parent=1 // pred_check
      _
    $region39: #{tpu_custom_call.1} parent=1 // pred_check_branch
      %413 = sbr.rel (0) target = $region41
    $region40: #{tpu_custom_call.1} parent=1 // pred_region
      %s415 = ssub.s32 256, 256
      %416 = vsyncadd [#allocation4], %s415
      %s417 = sshll.u32 [#allocation7], 4
      %s418 = int_to_ptr.vmem [resolvable:$true] %s417
      %423 = dma.vmem_to_hbm [thread:$0]  %s418, 256, %s7, [#allocation4], 128, 128, 8
    $region41: #{tpu_custom_call.1} parent=1 // pred_fallthru
      _
    // Predicated region
    $region42: #{tpu_custom_call.1} parent=1 // pred_check
      _
    $region43: #{tpu_custom_call.1} parent=1 // pred_check_branch
      %425 = sbr.rel (0) target = $region45
    $region44: #{tpu_custom_call.1} parent=1 // pred_region
      %426 = dma.done [#allocation4], 256
    $region45: #{tpu_custom_call.1} parent=1 // pred_fallthru
      _
    %427 = vsyncpa [#allocation3], 1
    %428 = vsyncpa [#allocation6], 1
    %429 = vsyncpa [#allocation4], 1

</llo_original>
